<compile_context>
chip_gen: v6e
topology: v6e:2x2x1
jax: 0.10.0
libtpu: 0.0.40
codegen_flags: <defaults>
</compile_context>

<pallas_src>
import functools

import jax
import jax.numpy as jnp
from jax.experimental import pallas as pl
from jax.experimental.pallas import tpu as pltpu


def _gap_conv1x1_kernel(x_ref, w_ref, b_ref, o_ref, *, inv_hw):
    # x_ref: [C_in, HW]   w_ref: [C_out, C_in]   b_ref: [C_out, 1] (f32)
    # o_ref: [C_out, 1]
    # Matmul-first on the MXU: both operands are in native orientation
    # (lhs contraction dim on lanes, rhs contraction dim on sublanes), so
    # bf16 operands go straight to the MXU with f32 accumulation.
    wx = jax.lax.dot_general(
        w_ref[...], x_ref[...],
        dimension_numbers=(((1,), (0,)), ((), ())),
        preferred_element_type=jnp.float32)            # [C_out, HW] f32

    # Tiny lane reduce ([52, 49] -> [52, 1]); apply the 1/HW mean scale and
    # the bias once on the small result (valid by linearity).
    s = jnp.sum(wx, axis=-1, keepdims=True)            # [C_out, 1]
    o_ref[...] = (s * jnp.float32(inv_hw) + b_ref[...]).astype(o_ref.dtype)


def gap_conv1x1(x, weight, bias, *, compute_dtype=None):
    """Global average pool + 1x1 conv (matches the PyTorch module).

    x: [N, C_in, H, W] (NCHW), weight: [C_out, C_in, 1, 1], bias: [C_out].
    compute_dtype: optional storage dtype for x / weight fed to the kernel
      (e.g. jnp.bfloat16 to halve HBM traffic); accumulation and the output
      stay f32-accurate (output dtype follows the original x dtype).

    Returns [N, C_out, 1, 1].
    """
    N, C, H, W = x.shape
    if N != 1:
        # TODO(synk): module spec is batch-1; for larger N add a "parallel"
        # grid axis over N instead of growing the single block.
        raise NotImplementedError("gap_conv1x1 is specialized for N == 1")
    Cout = weight.shape[0]
    HW = H * W
    out_dtype = x.dtype

    if compute_dtype is not None:
        x = x.astype(compute_dtype)
        weight = weight.astype(compute_dtype)

    # Layout glue: contiguous reshapes only (no transposes).
    x_r = x.reshape(N, C, HW)                    # [N, C_in, HW]
    w_r = weight.reshape(Cout, C)                # [C_out, C_in] (lane-dense)
    b_r = bias.reshape(Cout, 1).astype(jnp.float32)

    flops = 2 * Cout * C * HW + Cout * HW        # matmul + lane reduce
    bytes_accessed = (x_r.size * x_r.dtype.itemsize
                      + w_r.size * w_r.dtype.itemsize
                      + b_r.size * b_r.dtype.itemsize
                      + Cout * N * jnp.dtype(out_dtype).itemsize)

    kernel = functools.partial(_gap_conv1x1_kernel, inv_hw=1.0 / float(HW))

    out = pl.pallas_call(
        kernel,
        out_shape=jax.ShapeDtypeStruct((Cout, N), out_dtype),
        grid=(1,),  # single step: per-step overhead > total DMA time here
        in_specs=[
            # Batch dim squeezed (N == 1); lane (last) dim is HW.
            pl.BlockSpec((pl.Squeezed(), C, HW), lambda i: (0, 0, 0)),
            pl.BlockSpec((Cout, C), lambda i: (0, 0)),
            pl.BlockSpec((Cout, 1), lambda i: (0, 0)),
        ],
        out_specs=pl.BlockSpec((Cout, N), lambda i: (0, 0)),
        compiler_params=pltpu.CompilerParams(
            dimension_semantics=("arbitrary",)),
        cost_estimate=pl.CostEstimate(
            flops=int(flops),
            transcendentals=0,
            bytes_accessed=int(bytes_accessed)),
    )(x_r, w_r, b_r)

    # (C_out, 1) -> (N=1, C_out, 1, 1): order-preserving reshape (no copy).
    return out.reshape(N, Cout, 1, 1)


if __name__ == "__main__":
    key = jax.random.PRNGKey(0)
    kx, kw, kb = jax.random.split(key, 3)

    # Shapes from the module: input [1, 1248, 7, 7], Conv2d(1248 -> 52, 1x1).
    N, C_in, H, W = 1, 1248, 7, 7
    C_out = 52

    x = jax.random.normal(kx, (N, C_in, H, W), dtype=jnp.float32)
    weight = jax.random.normal(kw, (C_out, C_in, 1, 1), dtype=jnp.float32) * 0.02
    bias = jax.random.normal(kb, (C_out,), dtype=jnp.float32) * 0.02

    # Pure-JAX f32 reference (module semantics).
    ref_pool = jnp.mean(x, axis=(2, 3), keepdims=True)            # [N, C_in, 1, 1]
    ref = jnp.einsum("ncij,ocij->noij", ref_pool, weight) \
        + bias.reshape(1, C_out, 1, 1)

    # 1) Exact-precision path (f32 operands, f32 output).
    out = jax.block_until_ready(gap_conv1x1(x, weight, bias))
    assert out.shape == (N, C_out, 1, 1), out.shape
    assert jnp.allclose(out, ref, atol=1e-4, rtol=1e-4), \
        float(jnp.max(jnp.abs(out - ref)))

    # 2) Bandwidth-optimized path: bf16 operands from HBM, f32 accumulation.
    out_bf16 = jax.block_until_ready(
        gap_conv1x1(x, weight, bias, compute_dtype=jnp.bfloat16))
    xb = x.astype(jnp.bfloat16).astype(jnp.float32)
    wb = weight.astype(jnp.bfloat16).astype(jnp.float32)
    ref_b = jnp.einsum("ncij,ocij->noij",
                       jnp.mean(xb, axis=(2, 3), keepdims=True), wb) \
        + bias.reshape(1, C_out, 1, 1)
    assert out_bf16.shape == (N, C_out, 1, 1), out_bf16.shape
    assert jnp.allclose(out_bf16, ref_b, atol=2e-3, rtol=2e-3), \
        float(jnp.max(jnp.abs(out_bf16 - ref_b)))

    print("KERNEL_OK")
</pallas_src>

<mosaic_0001>
module attributes {stable_mosaic.version = 11 : i64} {
  func.func @_gap_conv1x1_kernel(%arg0: i32, %arg1: memref<1x1248x49xf32, #tpu.memory_space<vmem>>, %arg2: memref<52x1248xf32, #tpu.memory_space<vmem>>, %arg3: memref<52x1xf32, #tpu.memory_space<vmem>>, %arg4: memref<52x1xf32, #tpu.memory_space<vmem>>) attributes {dimension_semantics = [#tpu.dimension_semantics<arbitrary>], iteration_bounds = array<i64: 1>, scalar_prefetch = 0 : i64, scratch_operands = 0 : i64, tpu.core_type = #tpu.core_type<tc>, window_params = [{pipeline_mode = #tpu.pipeline_mode<synchronous>, transform_indices = @transform_0, window_bounds = array<i64: 1, 1248, 49>}, {pipeline_mode = #tpu.pipeline_mode<synchronous>, transform_indices = @transform_1, window_bounds = array<i64: 52, 1248>}, {pipeline_mode = #tpu.pipeline_mode<synchronous>, transform_indices = @transform_2, window_bounds = array<i64: 52, 1>}, {pipeline_mode = #tpu.pipeline_mode<synchronous>, transform_indices = @transform_3, window_bounds = array<i64: 52, 1>}]} {
    %c0 = arith.constant 0 : index
    %c0_0 = arith.constant 0 : index
    %0 = vector.load %arg2[%c0, %c0_0] : memref<52x1248xf32, #tpu.memory_space<vmem>>, vector<52x1248xf32>
    %c0_1 = arith.constant 0 : index
    %c0_2 = arith.constant 0 : index
    %c0_3 = arith.constant 0 : index
    %1 = vector.load %arg1[%c0_1, %c0_2, %c0_3] : memref<1x1248x49xf32, #tpu.memory_space<vmem>>, vector<1x1248x49xf32>
    %2 = vector.shape_cast %1 : vector<1x1248x49xf32> to vector<1248x49xf32>
    %cst = arith.constant dense<0.000000e+00> : vector<52x49xf32>
    %3 = tpu.matmul %0, %2, %cst {dimension_numbers = #tpu.dot_dimension_numbers<[1], [0], [0], [1], [0, 0, 1, 1], [], []>} : vector<52x1248xf32>, vector<1248x49xf32>, vector<52x49xf32> -> vector<52x49xf32>
    %cst_4 = arith.constant dense<0.000000e+00> : vector<52xf32>
    %4 = vector.multi_reduction <add>, %3, %cst_4 [1] : vector<52x49xf32> to vector<52xf32>
    %5 = vector.shape_cast %4 : vector<52xf32> to vector<52x1xf32>
    %cst_5 = arith.constant 0.0204081628 : f32
    %6 = vector.broadcast %cst_5 : f32 to vector<52x1xf32>
    %7 = arith.mulf %5, %6 : vector<52x1xf32>
    %c0_6 = arith.constant 0 : index
    %c0_7 = arith.constant 0 : index
    %8 = vector.load %arg3[%c0_6, %c0_7] : memref<52x1xf32, #tpu.memory_space<vmem>>, vector<52x1xf32>
    %9 = arith.addf %7, %8 : vector<52x1xf32>
    %c0_8 = arith.constant 0 : index
    %c0_9 = arith.constant 0 : index
    %10 = vector.load %arg4[%c0_8, %c0_9] : memref<52x1xf32, #tpu.memory_space<vmem>>, vector<52x1xf32>
    tpu.vector_store %arg4[%c0_8, %c0_9], %9 {strides = array<i32>} : memref<52x1xf32, #tpu.memory_space<vmem>>, vector<52x1xf32>,
    return
  }
  func.func @transform_0(%arg0: i32) -> (i32, i32, i32) {
    %c0_i32 = arith.constant 0 : i32
    %c0_i32_0 = arith.constant 0 : i32
    %c0_i32_1 = arith.constant 0 : i32
    %c0_i32_2 = arith.constant 0 : i32
    return %c0_i32, %c0_i32_0, %c0_i32_1 : i32, i32, i32
  }
  func.func @transform_1(%arg0: i32) -> (i32, i32) {
    %c0_i32 = arith.constant 0 : i32
    %c0_i32_0 = arith.constant 0 : i32
    %c0_i32_1 = arith.constant 0 : i32
    return %c0_i32, %c0_i32_0 : i32, i32
  }
  func.func @transform_2(%arg0: i32) -> (i32, i32) {
    %c0_i32 = arith.constant 0 : i32
    %c0_i32_0 = arith.constant 0 : i32
    %c0_i32_1 = arith.constant 0 : i32
    return %c0_i32, %c0_i32_0 : i32, i32
  }
  func.func @transform_3(%arg0: i32) -> (i32, i32) {
    %c0_i32 = arith.constant 0 : i32
    %c0_i32_0 = arith.constant 0 : i32
    %c0_i32_1 = arith.constant 0 : i32
    return %c0_i32, %c0_i32_0 : i32, i32
  }
}

</mosaic_0001>

<llo_original>
// kernel: tpu_custom_call.1
$region0: #{tpu_custom_call.1}
  #allocation0 [shape = 'u32[]', space=smem, size = 0x4, offset = 0x4, fixed_abs, tag = 'smem constant byte address 0x4 - core index']
  #allocation1 [shape = 'u32[144,128]{1,0:T(1,128)}', space=vmem, size = 0x12000, scoped, tag = 'internal scratch']
  %s0 = inlined_call_operand.vmem [shape: f32[1,1248,49], index: 0, kind: input, shape index: {}]
  %s1 = inlined_call_operand.vmem [shape: f32[52,1248], index: 1, kind: input, shape index: {}]
  %s2 = inlined_call_operand.vmem [shape: f32[52,1], index: 2, kind: input, shape index: {}]
  %s3 = inlined_call_operand.vmem [shape: f32[52,1], index: 3, kind: output, shape index: {}]
  %s4 = sld [smem:[#allocation0]]
  $region22: #{tpu_custom_call.1} parent=0
    _
  %s6 = ssub.s32 1, %s4
  %s7 = scalar_select 0, %s6, %s4
  // Predicated region
  $region2: #{tpu_custom_call.1} parent=0 // pred_check
    _
  $region3: #{tpu_custom_call.1} parent=0 // pred_check_branch
    %9 = sbr.rel (0) target = $region5
  $region4: #{tpu_custom_call.1} parent=0 // pred_region
    _
  $region5: #{tpu_custom_call.1} parent=0 // pred_fallthru
    _
  // Predicated region
  $region6: #{tpu_custom_call.1} parent=0 // pred_check
    _
  $region7: #{tpu_custom_call.1} parent=0 // pred_check_branch
    %11 = sbr.rel (0) target = $region9
  $region8: #{tpu_custom_call.1} parent=0 // pred_region
    _
  $region9: #{tpu_custom_call.1} parent=0 // pred_fallthru
    _
  // Predicated region
  $region10: #{tpu_custom_call.1} parent=0 // pred_check
    _
  $region11: #{tpu_custom_call.1} parent=0 // pred_check_branch
    %13 = sbr.rel (0) target = $region13
  $region12: #{tpu_custom_call.1} parent=0 // pred_region
    _
  $region13: #{tpu_custom_call.1} parent=0 // pred_fallthru
    _
  %v14 = vld [vmem:[%s1] sm:$0xff]
  %v15 = vld [vmem:[%s1 + $0x8] sm:$0xff]
  %v16 = vld [vmem:[%s1 + $0x10] sm:$0xff]
  %v17 = vld [vmem:[%s1 + $0x18] sm:$0xff]
  %v18 = vld [vmem:[%s1 + $0x20] sm:$0xff]
  %v19 = vld [vmem:[%s1 + $0x28] sm:$0xff]
  %v20 = vld [vmem:[%s1 + $0x30] sm:$0xff]
  %v21 = vld [vmem:[%s1 + $0x38] sm:$0xff]
  %v22 = vld [vmem:[%s1 + $0x40] sm:$0xff]
  %v23 = vld [vmem:[%s1 + $0x48] sm:$0xff]
  %v24 = vld [vmem:[%s1 + $0x50] sm:$0xff]
  %v25 = vld [vmem:[%s1 + $0x58] sm:$0xff]
  %v26 = vld [vmem:[%s1 + $0x60] sm:$0xff]
  %v27 = vld [vmem:[%s1 + $0x68] sm:$0xff]
  %v28 = vld [vmem:[%s1 + $0x70] sm:$0xff]
  %v29 = vld [vmem:[%s1 + $0x78] sm:$0xff]
  %v30 = vld [vmem:[%s1 + $0x80] sm:$0xff]
  %v31 = vld [vmem:[%s1 + $0x88] sm:$0xff]
  %v32 = vld [vmem:[%s1 + $0x90] sm:$0xff]
  %v33 = vld [vmem:[%s1 + $0x98] sm:$0xff]
  %v34 = vld [vmem:[%s1 + $0xa0] sm:$0xff]
  %v35 = vld [vmem:[%s1 + $0xa8] sm:$0xff]
  %v36 = vld [vmem:[%s1 + $0xb0] sm:$0xff]
  %v37 = vld [vmem:[%s1 + $0xb8] sm:$0xff]
  %v38 = vld [vmem:[%s1 + $0xc0] sm:$0xff]
  %v39 = vld [vmem:[%s1 + $0xc8] sm:$0xff]
  %v40 = vld [vmem:[%s1 + $0xd0] sm:$0xff]
  %v41 = vld [vmem:[%s1 + $0xd8] sm:$0xff]
  %v42 = vld [vmem:[%s1 + $0xe0] sm:$0xff]
  %v43 = vld [vmem:[%s1 + $0xe8] sm:$0xff]
  %v44 = vld [vmem:[%s1 + $0xf0] sm:$0xff]
  %v45 = vld [vmem:[%s1 + $0xf8] sm:$0xff]
  %v46 = vld [vmem:[%s1 + $0x100] sm:$0xff]
  %v47 = vld [vmem:[%s1 + $0x108] sm:$0xff]
  %v48 = vld [vmem:[%s1 + $0x110] sm:$0xff]
  %v49 = vld [vmem:[%s1 + $0x118] sm:$0xff]
  %v50 = vld [vmem:[%s1 + $0x120] sm:$0xff]
  %v51 = vld [vmem:[%s1 + $0x128] sm:$0xff]
  %v52 = vld [vmem:[%s1 + $0x130] sm:$0xff]
  %v53 = vld [vmem:[%s1 + $0x138] sm:$0xff]
  %v54 = vld [vmem:[%s1 + $0x140] sm:$0xff]
  %v55 = vld [vmem:[%s1 + $0x148] sm:$0xff]
  %v56 = vld [vmem:[%s1 + $0x150] sm:$0xff]
  %v57 = vld [vmem:[%s1 + $0x158] sm:$0xff]
  %v58 = vld [vmem:[%s1 + $0x160] sm:$0xff]
  %v59 = vld [vmem:[%s1 + $0x168] sm:$0xff]
  %v60 = vld [vmem:[%s1 + $0x170] sm:$0xff]
  %v61 = vld [vmem:[%s1 + $0x178] sm:$0xff]
  %v62 = vld [vmem:[%s1 + $0x180] sm:$0xff]
  %v63 = vld [vmem:[%s1 + $0x188] sm:$0xff]
  %v64 = vld [vmem:[%s1 + $0x190] sm:$0xff]
  %v65 = vld [vmem:[%s1 + $0x198] sm:$0xff]
  %v66 = vld [vmem:[%s1 + $0x1a0] sm:$0xff]
  %v67 = vld [vmem:[%s1 + $0x1a8] sm:$0xff]
  %v68 = vld [vmem:[%s1 + $0x1b0] sm:$0xff]
  %v69 = vld [vmem:[%s1 + $0x1b8] sm:$0xff]
  %v70 = vld [vmem:[%s1 + $0x1c0] sm:$0xff]
  %v71 = vld [vmem:[%s1 + $0x1c8] sm:$0xff]
  %v72 = vld [vmem:[%s1 + $0x1d0] sm:$0xff]
  %v73 = vld [vmem:[%s1 + $0x1d8] sm:$0xff]
  %v74 = vld [vmem:[%s1 + $0x1e0] sm:$0xf]
  %v75 = vld [vmem:[%s1 + $0x1e8] sm:$0xf]
  %v76 = vld [vmem:[%s1 + $0x1f0] sm:$0xf]
  %v77 = vld [vmem:[%s1 + $0x1f8] sm:$0xf]
  %v78 = vld [vmem:[%s1 + $0x200] sm:$0xf]
  %v79 = vld [vmem:[%s1 + $0x208] sm:$0xf]
  %v80 = vld [vmem:[%s1 + $0x210] sm:$0xf]
  %v81 = vld [vmem:[%s1 + $0x218] sm:$0xf]
  %v82 = vld [vmem:[%s1 + $0x220] sm:$0xf]
  %v83 = vld [vmem:[%s1 + $0x228] sm:$0xf]
  %v84 = vld [vmem:[%s0] sm:$0xff]
  %v85 = vld [vmem:[%s0 + $0x8] sm:$0xff]
  %v86 = vld [vmem:[%s0 + $0x10] sm:$0xff]
  %v87 = vld [vmem:[%s0 + $0x18] sm:$0xff]
  %v88 = vld [vmem:[%s0 + $0x20] sm:$0xff]
  %v89 = vld [vmem:[%s0 + $0x28] sm:$0xff]
  %v90 = vld [vmem:[%s0 + $0x30] sm:$0xff]
  %v91 = vld [vmem:[%s0 + $0x38] sm:$0xff]
  %v92 = vld [vmem:[%s0 + $0x40] sm:$0xff]
  %v93 = vld [vmem:[%s0 + $0x48] sm:$0xff]
  %v94 = vld [vmem:[%s0 + $0x50] sm:$0xff]
  %v95 = vld [vmem:[%s0 + $0x58] sm:$0xff]
  %v96 = vld [vmem:[%s0 + $0x60] sm:$0xff]
  %v97 = vld [vmem:[%s0 + $0x68] sm:$0xff]
  %v98 = vld [vmem:[%s0 + $0x70] sm:$0xff]
  %v99 = vld [vmem:[%s0 + $0x78] sm:$0xff]
  %v100 = vld [vmem:[%s0 + $0x80] sm:$0xff]
  %v101 = vld [vmem:[%s0 + $0x88] sm:$0xff]
  %v102 = vld [vmem:[%s0 + $0x90] sm:$0xff]
  %v103 = vld [vmem:[%s0 + $0x98] sm:$0xff]
  %v104 = vld [vmem:[%s0 + $0xa0] sm:$0xff]
  %v105 = vld [vmem:[%s0 + $0xa8] sm:$0xff]
  %v106 = vld [vmem:[%s0 + $0xb0] sm:$0xff]
  %v107 = vld [vmem:[%s0 + $0xb8] sm:$0xff]
  %v108 = vld [vmem:[%s0 + $0xc0] sm:$0xff]
  %v109 = vld [vmem:[%s0 + $0xc8] sm:$0xff]
  %v110 = vld [vmem:[%s0 + $0xd0] sm:$0xff]
  %v111 = vld [vmem:[%s0 + $0xd8] sm:$0xff]
  %v112 = vld [vmem:[%s0 + $0xe0] sm:$0xff]
  %v113 = vld [vmem:[%s0 + $0xe8] sm:$0xff]
  %v114 = vld [vmem:[%s0 + $0xf0] sm:$0xff]
  %v115 = vld [vmem:[%s0 + $0xf8] sm:$0xff]
  %v116 = vld [vmem:[%s0 + $0x100] sm:$0xff]
  %v117 = vld [vmem:[%s0 + $0x108] sm:$0xff]
  %v118 = vld [vmem:[%s0 + $0x110] sm:$0xff]
  %v119 = vld [vmem:[%s0 + $0x118] sm:$0xff]
  %v120 = vld [vmem:[%s0 + $0x120] sm:$0xff]
  %v121 = vld [vmem:[%s0 + $0x128] sm:$0xff]
  %v122 = vld [vmem:[%s0 + $0x130] sm:$0xff]
  %v123 = vld [vmem:[%s0 + $0x138] sm:$0xff]
  %v124 = vld [vmem:[%s0 + $0x140] sm:$0xff]
  %v125 = vld [vmem:[%s0 + $0x148] sm:$0xff]
  %v126 = vld [vmem:[%s0 + $0x150] sm:$0xff]
  %v127 = vld [vmem:[%s0 + $0x158] sm:$0xff]
  %v128 = vld [vmem:[%s0 + $0x160] sm:$0xff]
  %v129 = vld [vmem:[%s0 + $0x168] sm:$0xff]
  %v130 = vld [vmem:[%s0 + $0x170] sm:$0xff]
  %v131 = vld [vmem:[%s0 + $0x178] sm:$0xff]
  %v132 = vld [vmem:[%s0 + $0x180] sm:$0xff]
  %v133 = vld [vmem:[%s0 + $0x188] sm:$0xff]
  %v134 = vld [vmem:[%s0 + $0x190] sm:$0xff]
  %v135 = vld [vmem:[%s0 + $0x198] sm:$0xff]
  %v136 = vld [vmem:[%s0 + $0x1a0] sm:$0xff]
  %v137 = vld [vmem:[%s0 + $0x1a8] sm:$0xff]
  %v138 = vld [vmem:[%s0 + $0x1b0] sm:$0xff]
  %v139 = vld [vmem:[%s0 + $0x1b8] sm:$0xff]
  %v140 = vld [vmem:[%s0 + $0x1c0] sm:$0xff]
  %v141 = vld [vmem:[%s0 + $0x1c8] sm:$0xff]
  %v142 = vld [vmem:[%s0 + $0x1d0] sm:$0xff]
  %v143 = vld [vmem:[%s0 + $0x1d8] sm:$0xff]
  %v144 = vld [vmem:[%s0 + $0x1e0] sm:$0xff]
  %v145 = vld [vmem:[%s0 + $0x1e8] sm:$0xff]
  %v146 = vld [vmem:[%s0 + $0x1f0] sm:$0xff]
  %v147 = vld [vmem:[%s0 + $0x1f8] sm:$0xff]
  %v148 = vld [vmem:[%s0 + $0x200] sm:$0xff]
  %v149 = vld [vmem:[%s0 + $0x208] sm:$0xff]
  %v150 = vld [vmem:[%s0 + $0x210] sm:$0xff]
  %v151 = vld [vmem:[%s0 + $0x218] sm:$0xff]
  %v152 = vld [vmem:[%s0 + $0x220] sm:$0xff]
  %v153 = vld [vmem:[%s0 + $0x228] sm:$0xff]
  %v154 = vld [vmem:[%s0 + $0x230] sm:$0xff]
  %v155 = vld [vmem:[%s0 + $0x238] sm:$0xff]
  %v156 = vld [vmem:[%s0 + $0x240] sm:$0xff]
  %v157 = vld [vmem:[%s0 + $0x248] sm:$0xff]
  %v158 = vld [vmem:[%s0 + $0x250] sm:$0xff]
  %v159 = vld [vmem:[%s0 + $0x258] sm:$0xff]
  %v160 = vld [vmem:[%s0 + $0x260] sm:$0xff]
  %v161 = vld [vmem:[%s0 + $0x268] sm:$0xff]
  %v162 = vld [vmem:[%s0 + $0x270] sm:$0xff]
  %v163 = vld [vmem:[%s0 + $0x278] sm:$0xff]
  %v164 = vld [vmem:[%s0 + $0x280] sm:$0xff]
  %v165 = vld [vmem:[%s0 + $0x288] sm:$0xff]
  %v166 = vld [vmem:[%s0 + $0x290] sm:$0xff]
  %v167 = vld [vmem:[%s0 + $0x298] sm:$0xff]
  %v168 = vld [vmem:[%s0 + $0x2a0] sm:$0xff]
  %v169 = vld [vmem:[%s0 + $0x2a8] sm:$0xff]
  %v170 = vld [vmem:[%s0 + $0x2b0] sm:$0xff]
  %v171 = vld [vmem:[%s0 + $0x2b8] sm:$0xff]
  %v172 = vld [vmem:[%s0 + $0x2c0] sm:$0xff]
  %v173 = vld [vmem:[%s0 + $0x2c8] sm:$0xff]
  %v174 = vld [vmem:[%s0 + $0x2d0] sm:$0xff]
  %v175 = vld [vmem:[%s0 + $0x2d8] sm:$0xff]
  %v176 = vld [vmem:[%s0 + $0x2e0] sm:$0xff]
  %v177 = vld [vmem:[%s0 + $0x2e8] sm:$0xff]
  %v178 = vld [vmem:[%s0 + $0x2f0] sm:$0xff]
  %v179 = vld [vmem:[%s0 + $0x2f8] sm:$0xff]
  %v180 = vld [vmem:[%s0 + $0x300] sm:$0xff]
  %v181 = vld [vmem:[%s0 + $0x308] sm:$0xff]
  %v182 = vld [vmem:[%s0 + $0x310] sm:$0xff]
  %v183 = vld [vmem:[%s0 + $0x318] sm:$0xff]
  %v184 = vld [vmem:[%s0 + $0x320] sm:$0xff]
  %v185 = vld [vmem:[%s0 + $0x328] sm:$0xff]
  %v186 = vld [vmem:[%s0 + $0x330] sm:$0xff]
  %v187 = vld [vmem:[%s0 + $0x338] sm:$0xff]
  %v188 = vld [vmem:[%s0 + $0x340] sm:$0xff]
  %v189 = vld [vmem:[%s0 + $0x348] sm:$0xff]
  %v190 = vld [vmem:[%s0 + $0x350] sm:$0xff]
  %v191 = vld [vmem:[%s0 + $0x358] sm:$0xff]
  %v192 = vld [vmem:[%s0 + $0x360] sm:$0xff]
  %v193 = vld [vmem:[%s0 + $0x368] sm:$0xff]
  %v194 = vld [vmem:[%s0 + $0x370] sm:$0xff]
  %v195 = vld [vmem:[%s0 + $0x378] sm:$0xff]
  %v196 = vld [vmem:[%s0 + $0x380] sm:$0xff]
  %v197 = vld [vmem:[%s0 + $0x388] sm:$0xff]
  %v198 = vld [vmem:[%s0 + $0x390] sm:$0xff]
  %v199 = vld [vmem:[%s0 + $0x398] sm:$0xff]
  %v200 = vld [vmem:[%s0 + $0x3a0] sm:$0xff]
  %v201 = vld [vmem:[%s0 + $0x3a8] sm:$0xff]
  %v202 = vld [vmem:[%s0 + $0x3b0] sm:$0xff]
  %v203 = vld [vmem:[%s0 + $0x3b8] sm:$0xff]
  %v204 = vld [vmem:[%s0 + $0x3c0] sm:$0xff]
  %v205 = vld [vmem:[%s0 + $0x3c8] sm:$0xff]
  %v206 = vld [vmem:[%s0 + $0x3d0] sm:$0xff]
  %v207 = vld [vmem:[%s0 + $0x3d8] sm:$0xff]
  %v208 = vld [vmem:[%s0 + $0x3e0] sm:$0xff]
  %v209 = vld [vmem:[%s0 + $0x3e8] sm:$0xff]
  %v210 = vld [vmem:[%s0 + $0x3f0] sm:$0xff]
  %v211 = vld [vmem:[%s0 + $0x3f8] sm:$0xff]
  %v212 = vld [vmem:[%s0 + $0x400] sm:$0xff]
  %v213 = vld [vmem:[%s0 + $0x408] sm:$0xff]
  %v214 = vld [vmem:[%s0 + $0x410] sm:$0xff]
  %v215 = vld [vmem:[%s0 + $0x418] sm:$0xff]
  %v216 = vld [vmem:[%s0 + $0x420] sm:$0xff]
  %v217 = vld [vmem:[%s0 + $0x428] sm:$0xff]
  %v218 = vld [vmem:[%s0 + $0x430] sm:$0xff]
  %v219 = vld [vmem:[%s0 + $0x438] sm:$0xff]
  %v220 = vld [vmem:[%s0 + $0x440] sm:$0xff]
  %v221 = vld [vmem:[%s0 + $0x448] sm:$0xff]
  %v222 = vld [vmem:[%s0 + $0x450] sm:$0xff]
  %v223 = vld [vmem:[%s0 + $0x458] sm:$0xff]
  %v224 = vld [vmem:[%s0 + $0x460] sm:$0xff]
  %v225 = vld [vmem:[%s0 + $0x468] sm:$0xff]
  %v226 = vld [vmem:[%s0 + $0x470] sm:$0xff]
  %v227 = vld [vmem:[%s0 + $0x478] sm:$0xff]
  %v228 = vld [vmem:[%s0 + $0x480] sm:$0xff]
  %v229 = vld [vmem:[%s0 + $0x488] sm:$0xff]
  %v230 = vld [vmem:[%s0 + $0x490] sm:$0xff]
  %v231 = vld [vmem:[%s0 + $0x498] sm:$0xff]
  %v232 = vld [vmem:[%s0 + $0x4a0] sm:$0xff]
  %v233 = vld [vmem:[%s0 + $0x4a8] sm:$0xff]
  %v234 = vld [vmem:[%s0 + $0x4b0] sm:$0xff]
  %v235 = vld [vmem:[%s0 + $0x4b8] sm:$0xff]
  %v236 = vld [vmem:[%s0 + $0x4c0] sm:$0xff]
  %v237 = vld [vmem:[%s0 + $0x4c8] sm:$0xff]
  %v238 = vld [vmem:[%s0 + $0x4d0] sm:$0xff]
  %v239 = vld [vmem:[%s0 + $0x4d8] sm:$0xff]
  %vm240 = vcmask 785408
  %v242 = vsel %vm240, %v23, 0
  %v245 = vsel %vm240, %v33, 0
  %v248 = vsel %vm240, %v43, 0
  %v251 = vsel %vm240, %v53, 0
  %v254 = vsel %vm240, %v63, 0
  %v257 = vsel %vm240, %v73, 0
  %v260 = vsel %vm240, %v83, 0
  %262 = vmatprep.subr.mxu0 0.0
  %263 = vmatpush1.msra.mxu0 %v99
  %264 = vmatprep.subr.mxu0 0.0
  %265 = vmatpush1.msra.mxu0 %v98
  %266 = vmatprep.subr.mxu0 0.0
  %267 = vmatpush1.msra.mxu0 %v97
  %268 = vmatprep.subr.mxu0 0.0
  %269 = vmatpush1.msra.mxu0 %v96
  %270 = vmatprep.subr.mxu0 0.0
  %271 = vmatpush1.msra.mxu0 %v95
  %272 = vmatprep.subr.mxu0 0.0
  %273 = vmatpush1.msra.mxu0 %v94
  %274 = vmatprep.subr.mxu0 0.0
  %275 = vmatpush1.msra.mxu0 %v93
  %276 = vmatprep.subr.mxu0 0.0
  %277 = vmatpush1.msra.mxu0 %v92
  %278 = vmatprep.subr.mxu0 0.0
  %279 = vmatpush1.msra.mxu0 %v91
  %280 = vmatprep.subr.mxu0 0.0
  %281 = vmatpush1.msra.mxu0 %v90
  %282 = vmatprep.subr.mxu0 0.0
  %283 = vmatpush1.msra.mxu0 %v89
  %284 = vmatprep.subr.mxu0 0.0
  %285 = vmatpush1.msra.mxu0 %v88
  %286 = vmatprep.subr.mxu0 0.0
  %287 = vmatpush1.msra.mxu0 %v87
  %288 = vmatprep.subr.mxu0 0.0
  %289 = vmatpush1.msra.mxu0 %v86
  %290 = vmatprep.subr.mxu0 0.0
  %291 = vmatpush1.msra.mxu0 %v85
  %292 = vmatprep.subr.mxu0 0.0
  %293 = vmatpush1.msra.mxu0 %v84
  %294 = vmatprep.subr.mxu0 0.0
  %295 = vmatpush2.msra.mxu0 %v115
  %296 = vmatprep.subr.mxu0 0.0
  %297 = vmatpush2.msra.mxu0 %v114
  %298 = vmatprep.subr.mxu0 0.0
  %299 = vmatpush2.msra.mxu0 %v113
  %300 = vmatprep.subr.mxu0 0.0
  %301 = vmatpush2.msra.mxu0 %v112
  %302 = vmatprep.subr.mxu0 0.0
  %303 = vmatpush2.msra.mxu0 %v111
  %304 = vmatprep.subr.mxu0 0.0
  %305 = vmatpush2.msra.mxu0 %v110
  %306 = vmatprep.subr.mxu0 0.0
  %307 = vmatpush2.msra.mxu0 %v109
  %308 = vmatprep.subr.mxu0 0.0
  %309 = vmatpush2.msra.mxu0 %v108
  %310 = vmatprep.subr.mxu0 0.0
  %311 = vmatpush2.msra.mxu0 %v107
  %312 = vmatprep.subr.mxu0 0.0
  %313 = vmatpush2.msra.mxu0 %v106
  %314 = vmatprep.subr.mxu0 0.0
  %315 = vmatpush2.msra.mxu0 %v105
  %316 = vmatprep.subr.mxu0 0.0
  %317 = vmatpush2.msra.mxu0 %v104
  %318 = vmatprep.subr.mxu0 0.0
  %319 = vmatpush2.msra.mxu0 %v103
  %320 = vmatprep.subr.mxu0 0.0
  %321 = vmatpush2.msra.mxu0 %v102
  %322 = vmatprep.subr.mxu0 0.0
  %323 = vmatpush2.msra.mxu0 %v101
  %324 = vmatprep.subr.mxu0 0.0
  %325 = vmatpush2.msra.mxu0 %v100
  %326 = vmatprep.mubr.f32.mxu0 %v15
  %327 = vmatmul.mubr.f32.gmra.mxu0 %v14
  %v328 = vpop.f32.mrf.mxu0
  %v329 = vadd.f32 0.0, %v328
  %v330 = vpop.f32.mrf.mxu0
  %331 = vmatprep.mubr.f32.mxu0 %v25
  %332 = vmatmul.mubr.f32.gmra.mxu0 %v24
  %v333 = vpop.f32.mrf.mxu0
  %v334 = vadd.f32 0.0, %v333
  %v335 = vpop.f32.mrf.mxu0
  %336 = vmatprep.mubr.f32.mxu0 %v35
  %337 = vmatmul.mubr.f32.gmra.mxu0 %v34
  %v338 = vpop.f32.mrf.mxu0
  %v339 = vadd.f32 0.0, %v338
  %v340 = vpop.f32.mrf.mxu0
  %341 = vmatprep.mubr.f32.mxu0 %v45
  %342 = vmatmul.mubr.f32.gmra.mxu0 %v44
  %v343 = vpop.f32.mrf.mxu0
  %v344 = vadd.f32 0.0, %v343
  %v345 = vpop.f32.mrf.mxu0
  %346 = vmatprep.mubr.f32.mxu0 %v55
  %347 = vmatmul.mubr.f32.gmra.mxu0 %v54
  %v348 = vpop.f32.mrf.mxu0
  %v349 = vadd.f32 0.0, %v348
  %v350 = vpop.f32.mrf.mxu0
  %351 = vmatprep.mubr.f32.mxu0 %v65
  %352 = vmatmul.mubr.f32.gmra.mxu0 %v64
  %v353 = vpop.f32.mrf.mxu0
  %v354 = vadd.f32 0.0, %v353
  %v355 = vpop.f32.mrf.mxu0
  %356 = vmatprep.mubr.f32.mxu0 %v75
  %357 = vmatmul.mubr.f32.gmra.mxu0 %v74
  %v358 = vpop.f32.mrf.mxu0
  %v359 = vadd.f32 0.0, %v358
  %v360 = vpop.f32.mrf.mxu0
  %361 = vdwg.mxu0
  %362 = vmatprep.subr.mxu0 0.0
  %363 = vmatpush1.msra.mxu0 %v131
  %364 = vmatprep.subr.mxu0 0.0
  %365 = vmatpush1.msra.mxu0 %v130
  %366 = vmatprep.subr.mxu0 0.0
  %367 = vmatpush1.msra.mxu0 %v129
  %368 = vmatprep.subr.mxu0 0.0
  %369 = vmatpush1.msra.mxu0 %v128
  %370 = vmatprep.subr.mxu0 0.0
  %371 = vmatpush1.msra.mxu0 %v127
  %372 = vmatprep.subr.mxu0 0.0
  %373 = vmatpush1.msra.mxu0 %v126
  %374 = vmatprep.subr.mxu0 0.0
  %375 = vmatpush1.msra.mxu0 %v125
  %376 = vmatprep.subr.mxu0 0.0
  %377 = vmatpush1.msra.mxu0 %v124
  %378 = vmatprep.subr.mxu0 0.0
  %379 = vmatpush1.msra.mxu0 %v123
  %380 = vmatprep.subr.mxu0 0.0
  %381 = vmatpush1.msra.mxu0 %v122
  %382 = vmatprep.subr.mxu0 0.0
  %383 = vmatpush1.msra.mxu0 %v121
  %384 = vmatprep.subr.mxu0 0.0
  %385 = vmatpush1.msra.mxu0 %v120
  %386 = vmatprep.subr.mxu0 0.0
  %387 = vmatpush1.msra.mxu0 %v119
  %388 = vmatprep.subr.mxu0 0.0
  %389 = vmatpush1.msra.mxu0 %v118
  %390 = vmatprep.subr.mxu0 0.0
  %391 = vmatpush1.msra.mxu0 %v117
  %392 = vmatprep.subr.mxu0 0.0
  %393 = vmatpush1.msra.mxu0 %v116
  %394 = vmatprep.subr.mxu0 0.0
  %395 = vmatpush2.msra.mxu0 %v147
  %396 = vmatprep.subr.mxu0 0.0
  %397 = vmatpush2.msra.mxu0 %v146
  %398 = vmatprep.subr.mxu0 0.0
  %399 = vmatpush2.msra.mxu0 %v145
  %400 = vmatprep.subr.mxu0 0.0
  %401 = vmatpush2.msra.mxu0 %v144
  %402 = vmatprep.subr.mxu0 0.0
  %403 = vmatpush2.msra.mxu0 %v143
  %404 = vmatprep.subr.mxu0 0.0
  %405 = vmatpush2.msra.mxu0 %v142
  %406 = vmatprep.subr.mxu0 0.0
  %407 = vmatpush2.msra.mxu0 %v141
  %408 = vmatprep.subr.mxu0 0.0
  %409 = vmatpush2.msra.mxu0 %v140
  %410 = vmatprep.subr.mxu0 0.0
  %411 = vmatpush2.msra.mxu0 %v139
  %412 = vmatprep.subr.mxu0 0.0
  %413 = vmatpush2.msra.mxu0 %v138
  %414 = vmatprep.subr.mxu0 0.0
  %415 = vmatpush2.msra.mxu0 %v137
  %416 = vmatprep.subr.mxu0 0.0
  %417 = vmatpush2.msra.mxu0 %v136
  %418 = vmatprep.subr.mxu0 0.0
  %419 = vmatpush2.msra.mxu0 %v135
  %420 = vmatprep.subr.mxu0 0.0
  %421 = vmatpush2.msra.mxu0 %v134
  %422 = vmatprep.subr.mxu0 0.0
  %423 = vmatpush2.msra.mxu0 %v133
  %424 = vmatprep.subr.mxu0 0.0
  %425 = vmatpush2.msra.mxu0 %v132
  %426 = vmatprep.mubr.f32.mxu0 %v17
  %427 = vmatmul.mubr.f32.gmra.mxu0 %v16
  %v428 = vpop.f32.mrf.mxu0
  %v429 = vadd.f32 %v329, %v428
  %v430 = vpop.f32.mrf.mxu0
  %431 = vmatprep.mubr.f32.mxu0 %v27
  %432 = vmatmul.mubr.f32.gmra.mxu0 %v26
  %v433 = vpop.f32.mrf.mxu0
  %v434 = vadd.f32 %v334, %v433
  %v435 = vpop.f32.mrf.mxu0
  %436 = vmatprep.mubr.f32.mxu0 %v37
  %437 = vmatmul.mubr.f32.gmra.mxu0 %v36
  %v438 = vpop.f32.mrf.mxu0
  %v439 = vadd.f32 %v339, %v438
  %v440 = vpop.f32.mrf.mxu0
  %441 = vmatprep.mubr.f32.mxu0 %v47
  %442 = vmatmul.mubr.f32.gmra.mxu0 %v46
  %v443 = vpop.f32.mrf.mxu0
  %v444 = vadd.f32 %v344, %v443
  %v445 = vpop.f32.mrf.mxu0
  %446 = vmatprep.mubr.f32.mxu0 %v57
  %447 = vmatmul.mubr.f32.gmra.mxu0 %v56
  %v448 = vpop.f32.mrf.mxu0
  %v449 = vadd.f32 %v349, %v448
  %v450 = vpop.f32.mrf.mxu0
  %451 = vmatprep.mubr.f32.mxu0 %v67
  %452 = vmatmul.mubr.f32.gmra.mxu0 %v66
  %v453 = vpop.f32.mrf.mxu0
  %v454 = vadd.f32 %v354, %v453
  %v455 = vpop.f32.mrf.mxu0
  %456 = vmatprep.mubr.f32.mxu0 %v77
  %457 = vmatmul.mubr.f32.gmra.mxu0 %v76
  %v458 = vpop.f32.mrf.mxu0
  %v459 = vadd.f32 %v359, %v458
  %v460 = vpop.f32.mrf.mxu0
  %461 = vdwg.mxu0
  %462 = vmatprep.subr.mxu0 0.0
  %463 = vmatpush1.msra.mxu0 %v163
  %464 = vmatprep.subr.mxu0 0.0
  %465 = vmatpush1.msra.mxu0 %v162
  %466 = vmatprep.subr.mxu0 0.0
  %467 = vmatpush1.msra.mxu0 %v161
  %468 = vmatprep.subr.mxu0 0.0
  %469 = vmatpush1.msra.mxu0 %v160
  %470 = vmatprep.subr.mxu0 0.0
  %471 = vmatpush1.msra.mxu0 %v159
  %472 = vmatprep.subr.mxu0 0.0
  %473 = vmatpush1.msra.mxu0 %v158
  %474 = vmatprep.subr.mxu0 0.0
  %475 = vmatpush1.msra.mxu0 %v157
  %476 = vmatprep.subr.mxu0 0.0
  %477 = vmatpush1.msra.mxu0 %v156
  %478 = vmatprep.subr.mxu0 0.0
  %479 = vmatpush1.msra.mxu0 %v155
  %480 = vmatprep.subr.mxu0 0.0
  %481 = vmatpush1.msra.mxu0 %v154
  %482 = vmatprep.subr.mxu0 0.0
  %483 = vmatpush1.msra.mxu0 %v153
  %484 = vmatprep.subr.mxu0 0.0
  %485 = vmatpush1.msra.mxu0 %v152
  %486 = vmatprep.subr.mxu0 0.0
  %487 = vmatpush1.msra.mxu0 %v151
  %488 = vmatprep.subr.mxu0 0.0
  %489 = vmatpush1.msra.mxu0 %v150
  %490 = vmatprep.subr.mxu0 0.0
  %491 = vmatpush1.msra.mxu0 %v149
  %492 = vmatprep.subr.mxu0 0.0
  %493 = vmatpush1.msra.mxu0 %v148
  %494 = vmatprep.subr.mxu0 0.0
  %495 = vmatpush2.msra.mxu0 %v179
  %496 = vmatprep.subr.mxu0 0.0
  %497 = vmatpush2.msra.mxu0 %v178
  %498 = vmatprep.subr.mxu0 0.0
  %499 = vmatpush2.msra.mxu0 %v177
  %500 = vmatprep.subr.mxu0 0.0
  %501 = vmatpush2.msra.mxu0 %v176
  %502 = vmatprep.subr.mxu0 0.0
  %503 = vmatpush2.msra.mxu0 %v175
  %504 = vmatprep.subr.mxu0 0.0
  %505 = vmatpush2.msra.mxu0 %v174
  %506 = vmatprep.subr.mxu0 0.0
  %507 = vmatpush2.msra.mxu0 %v173
  %508 = vmatprep.subr.mxu0 0.0
  %509 = vmatpush2.msra.mxu0 %v172
  %510 = vmatprep.subr.mxu0 0.0
  %511 = vmatpush2.msra.mxu0 %v171
  %512 = vmatprep.subr.mxu0 0.0
  %513 = vmatpush2.msra.mxu0 %v170
  %514 = vmatprep.subr.mxu0 0.0
  %515 = vmatpush2.msra.mxu0 %v169
  %516 = vmatprep.subr.mxu0 0.0
  %517 = vmatpush2.msra.mxu0 %v168
  %518 = vmatprep.subr.mxu0 0.0
  %519 = vmatpush2.msra.mxu0 %v167
  %520 = vmatprep.subr.mxu0 0.0
  %521 = vmatpush2.msra.mxu0 %v166
  %522 = vmatprep.subr.mxu0 0.0
  %523 = vmatpush2.msra.mxu0 %v165
  %524 = vmatprep.subr.mxu0 0.0
  %525 = vmatpush2.msra.mxu0 %v164
  %526 = vmatprep.mubr.f32.mxu0 %v19
  %527 = vmatmul.mubr.f32.gmra.mxu0 %v18
  %v528 = vpop.f32.mrf.mxu0
  %v529 = vadd.f32 %v429, %v528
  %v530 = vpop.f32.mrf.mxu0
  %531 = vmatprep.mubr.f32.mxu0 %v29
  %532 = vmatmul.mubr.f32.gmra.mxu0 %v28
  %v533 = vpop.f32.mrf.mxu0
  %v534 = vadd.f32 %v434, %v533
  %v535 = vpop.f32.mrf.mxu0
  %536 = vmatprep.mubr.f32.mxu0 %v39
  %537 = vmatmul.mubr.f32.gmra.mxu0 %v38
  %v538 = vpop.f32.mrf.mxu0
  %v539 = vadd.f32 %v439, %v538
  %v540 = vpop.f32.mrf.mxu0
  %541 = vmatprep.mubr.f32.mxu0 %v49
  %542 = vmatmul.mubr.f32.gmra.mxu0 %v48
  %v543 = vpop.f32.mrf.mxu0
  %v544 = vadd.f32 %v444, %v543
  %v545 = vpop.f32.mrf.mxu0
  %546 = vmatprep.mubr.f32.mxu0 %v59
  %547 = vmatmul.mubr.f32.gmra.mxu0 %v58
  %v548 = vpop.f32.mrf.mxu0
  %v549 = vadd.f32 %v449, %v548
  %v550 = vpop.f32.mrf.mxu0
  %551 = vmatprep.mubr.f32.mxu0 %v69
  %552 = vmatmul.mubr.f32.gmra.mxu0 %v68
  %v553 = vpop.f32.mrf.mxu0
  %v554 = vadd.f32 %v454, %v553
  %v555 = vpop.f32.mrf.mxu0
  %556 = vmatprep.mubr.f32.mxu0 %v79
  %557 = vmatmul.mubr.f32.gmra.mxu0 %v78
  %v558 = vpop.f32.mrf.mxu0
  %v559 = vadd.f32 %v459, %v558
  %v560 = vpop.f32.mrf.mxu0
  %561 = vdwg.mxu0
  %562 = vmatprep.subr.mxu0 0.0
  %563 = vmatpush1.msra.mxu0 %v195
  %564 = vmatprep.subr.mxu0 0.0
  %565 = vmatpush1.msra.mxu0 %v194
  %566 = vmatprep.subr.mxu0 0.0
  %567 = vmatpush1.msra.mxu0 %v193
  %568 = vmatprep.subr.mxu0 0.0
  %569 = vmatpush1.msra.mxu0 %v192
  %570 = vmatprep.subr.mxu0 0.0
  %571 = vmatpush1.msra.mxu0 %v191
  %572 = vmatprep.subr.mxu0 0.0
  %573 = vmatpush1.msra.mxu0 %v190
  %574 = vmatprep.subr.mxu0 0.0
  %575 = vmatpush1.msra.mxu0 %v189
  %576 = vmatprep.subr.mxu0 0.0
  %577 = vmatpush1.msra.mxu0 %v188
  %578 = vmatprep.subr.mxu0 0.0
  %579 = vmatpush1.msra.mxu0 %v187
  %580 = vmatprep.subr.mxu0 0.0
  %581 = vmatpush1.msra.mxu0 %v186
  %582 = vmatprep.subr.mxu0 0.0
  %583 = vmatpush1.msra.mxu0 %v185
  %584 = vmatprep.subr.mxu0 0.0
  %585 = vmatpush1.msra.mxu0 %v184
  %586 = vmatprep.subr.mxu0 0.0
  %587 = vmatpush1.msra.mxu0 %v183
  %588 = vmatprep.subr.mxu0 0.0
  %589 = vmatpush1.msra.mxu0 %v182
  %590 = vmatprep.subr.mxu0 0.0
  %591 = vmatpush1.msra.mxu0 %v181
  %592 = vmatprep.subr.mxu0 0.0
  %593 = vmatpush1.msra.mxu0 %v180
  %594 = vmatprep.subr.mxu0 0.0
  %595 = vmatpush2.msra.mxu0 %v211
  %596 = vmatprep.subr.mxu0 0.0
  %597 = vmatpush2.msra.mxu0 %v210
  %598 = vmatprep.subr.mxu0 0.0
  %599 = vmatpush2.msra.mxu0 %v209
  %600 = vmatprep.subr.mxu0 0.0
  %601 = vmatpush2.msra.mxu0 %v208
  %602 = vmatprep.subr.mxu0 0.0
  %603 = vmatpush2.msra.mxu0 %v207
  %604 = vmatprep.subr.mxu0 0.0
  %605 = vmatpush2.msra.mxu0 %v206
  %606 = vmatprep.subr.mxu0 0.0
  %607 = vmatpush2.msra.mxu0 %v205
  %608 = vmatprep.subr.mxu0 0.0
  %609 = vmatpush2.msra.mxu0 %v204
  %610 = vmatprep.subr.mxu0 0.0
  %611 = vmatpush2.msra.mxu0 %v203
  %612 = vmatprep.subr.mxu0 0.0
  %613 = vmatpush2.msra.mxu0 %v202
  %614 = vmatprep.subr.mxu0 0.0
  %615 = vmatpush2.msra.mxu0 %v201
  %616 = vmatprep.subr.mxu0 0.0
  %617 = vmatpush2.msra.mxu0 %v200
  %618 = vmatprep.subr.mxu0 0.0
  %619 = vmatpush2.msra.mxu0 %v199
  %620 = vmatprep.subr.mxu0 0.0
  %621 = vmatpush2.msra.mxu0 %v198
  %622 = vmatprep.subr.mxu0 0.0
  %623 = vmatpush2.msra.mxu0 %v197
  %624 = vmatprep.subr.mxu0 0.0
  %625 = vmatpush2.msra.mxu0 %v196
  %626 = vmatprep.mubr.f32.mxu0 %v21
  %627 = vmatmul.mubr.f32.gmra.mxu0 %v20
  %v628 = vpop.f32.mrf.mxu0
  %v629 = vadd.f32 %v529, %v628
  %v630 = vpop.f32.mrf.mxu0
  %631 = vmatprep.mubr.f32.mxu0 %v31
  %632 = vmatmul.mubr.f32.gmra.mxu0 %v30
  %v633 = vpop.f32.mrf.mxu0
  %v634 = vadd.f32 %v534, %v633
  %v635 = vpop.f32.mrf.mxu0
  %636 = vmatprep.mubr.f32.mxu0 %v41
  %637 = vmatmul.mubr.f32.gmra.mxu0 %v40
  %v638 = vpop.f32.mrf.mxu0
  %v639 = vadd.f32 %v539, %v638
  %v640 = vpop.f32.mrf.mxu0
  %641 = vmatprep.mubr.f32.mxu0 %v51
  %642 = vmatmul.mubr.f32.gmra.mxu0 %v50
  %v643 = vpop.f32.mrf.mxu0
  %v644 = vadd.f32 %v544, %v643
  %v645 = vpop.f32.mrf.mxu0
  %646 = vmatprep.mubr.f32.mxu0 %v61
  %647 = vmatmul.mubr.f32.gmra.mxu0 %v60
  %v648 = vpop.f32.mrf.mxu0
  %v649 = vadd.f32 %v549, %v648
  %v650 = vpop.f32.mrf.mxu0
  %651 = vmatprep.mubr.f32.mxu0 %v71
  %652 = vmatmul.mubr.f32.gmra.mxu0 %v70
  %v653 = vpop.f32.mrf.mxu0
  %v654 = vadd.f32 %v554, %v653
  %v655 = vpop.f32.mrf.mxu0
  %656 = vmatprep.mubr.f32.mxu0 %v81
  %657 = vmatmul.mubr.f32.gmra.mxu0 %v80
  %v658 = vpop.f32.mrf.mxu0
  %v659 = vadd.f32 %v559, %v658
  %v660 = vpop.f32.mrf.mxu0
  %661 = vdwg.mxu0
  %662 = vmatprep.subr.mxu0 0.0
  %663 = vmatpush1.msra.mxu0 %v227
  %664 = vmatprep.subr.mxu0 0.0
  %665 = vmatpush1.msra.mxu0 %v226
  %666 = vmatprep.subr.mxu0 0.0
  %667 = vmatpush1.msra.mxu0 %v225
  %668 = vmatprep.subr.mxu0 0.0
  %669 = vmatpush1.msra.mxu0 %v224
  %670 = vmatprep.subr.mxu0 0.0
  %671 = vmatpush1.msra.mxu0 %v223
  %672 = vmatprep.subr.mxu0 0.0
  %673 = vmatpush1.msra.mxu0 %v222
  %674 = vmatprep.subr.mxu0 0.0
  %675 = vmatpush1.msra.mxu0 %v221
  %676 = vmatprep.subr.mxu0 0.0
  %677 = vmatpush1.msra.mxu0 %v220
  %678 = vmatprep.subr.mxu0 0.0
  %679 = vmatpush1.msra.mxu0 %v219
  %680 = vmatprep.subr.mxu0 0.0
  %681 = vmatpush1.msra.mxu0 %v218
  %682 = vmatprep.subr.mxu0 0.0
  %683 = vmatpush1.msra.mxu0 %v217
  %684 = vmatprep.subr.mxu0 0.0
  %685 = vmatpush1.msra.mxu0 %v216
  %686 = vmatprep.subr.mxu0 0.0
  %687 = vmatpush1.msra.mxu0 %v215
  %688 = vmatprep.subr.mxu0 0.0
  %689 = vmatpush1.msra.mxu0 %v214
  %690 = vmatprep.subr.mxu0 0.0
  %691 = vmatpush1.msra.mxu0 %v213
  %692 = vmatprep.subr.mxu0 0.0
  %693 = vmatpush1.msra.mxu0 %v212
  %694 = vmatprep.subr.mxu0 0.0
  %695 = vmatpush2.msra.mxu0 0.0
  %696 = vmatprep.subr.mxu0 0.0
  %697 = vmatpush2.msra.mxu0 0.0
  %698 = vmatprep.subr.mxu0 0.0
  %699 = vmatpush2.msra.mxu0 0.0
  %700 = vmatprep.subr.mxu0 0.0
  %701 = vmatpush2.msra.mxu0 0.0
  %702 = vmatprep.subr.mxu0 0.0
  %703 = vmatpush2.msra.mxu0 %v239
  %704 = vmatprep.subr.mxu0 0.0
  %705 = vmatpush2.msra.mxu0 %v238
  %706 = vmatprep.subr.mxu0 0.0
  %707 = vmatpush2.msra.mxu0 %v237
  %708 = vmatprep.subr.mxu0 0.0
  %709 = vmatpush2.msra.mxu0 %v236
  %710 = vmatprep.subr.mxu0 0.0
  %711 = vmatpush2.msra.mxu0 %v235
  %712 = vmatprep.subr.mxu0 0.0
  %713 = vmatpush2.msra.mxu0 %v234
  %714 = vmatprep.subr.mxu0 0.0
  %715 = vmatpush2.msra.mxu0 %v233
  %716 = vmatprep.subr.mxu0 0.0
  %717 = vmatpush2.msra.mxu0 %v232
  %718 = vmatprep.subr.mxu0 0.0
  %719 = vmatpush2.msra.mxu0 %v231
  %720 = vmatprep.subr.mxu0 0.0
  %721 = vmatpush2.msra.mxu0 %v230
  %722 = vmatprep.subr.mxu0 0.0
  %723 = vmatpush2.msra.mxu0 %v229
  %724 = vmatprep.subr.mxu0 0.0
  %725 = vmatpush2.msra.mxu0 %v228
  %726 = vmatprep.mubr.f32.mxu0 %v242
  %727 = vmatmul.mubr.f32.gmra.mxu0 %v22
  %v728 = vpop.f32.mrf.mxu0
  %v729 = vadd.f32 %v629, %v728
  %v730 = vpop.f32.mrf.mxu0
  %731 = vmatprep.mubr.f32.mxu0 %v245
  %732 = vmatmul.mubr.f32.gmra.mxu0 %v32
  %v733 = vpop.f32.mrf.mxu0
  %v734 = vadd.f32 %v634, %v733
  %v735 = vpop.f32.mrf.mxu0
  %736 = vmatprep.mubr.f32.mxu0 %v248
  %737 = vmatmul.mubr.f32.gmra.mxu0 %v42
  %v738 = vpop.f32.mrf.mxu0
  %v739 = vadd.f32 %v639, %v738
  %v740 = vpop.f32.mrf.mxu0
  %741 = vmatprep.mubr.f32.mxu0 %v251
  %742 = vmatmul.mubr.f32.gmra.mxu0 %v52
  %v743 = vpop.f32.mrf.mxu0
  %v744 = vadd.f32 %v644, %v743
  %v745 = vpop.f32.mrf.mxu0
  %746 = vmatprep.mubr.f32.mxu0 %v254
  %747 = vmatmul.mubr.f32.gmra.mxu0 %v62
  %v748 = vpop.f32.mrf.mxu0
  %v749 = vadd.f32 %v649, %v748
  %v750 = vpop.f32.mrf.mxu0
  %751 = vmatprep.mubr.f32.mxu0 %v257
  %752 = vmatmul.mubr.f32.gmra.mxu0 %v72
  %v753 = vpop.f32.mrf.mxu0
  %v754 = vadd.f32 %v654, %v753
  %v755 = vpop.f32.mrf.mxu0
  %756 = vmatprep.mubr.f32.mxu0 %v260
  %757 = vmatmul.mubr.f32.gmra.mxu0 %v82
  %v758 = vpop.f32.mrf.mxu0
  %v759 = vadd.f32 %v659, %v758
  %v760 = vpop.f32.mrf.mxu0
  %761 = vdwg.mxu0
  %vm762 = vcmask 400384
  %v763 = vsel %vm762, %v729, 0.0
  %764 = vadd.xlane.f32.xlu0 %v763
  %v765 = vpop.xlane.xlu0 %764
  %v766 = vsel %vm762, %v734, 0.0
  %767 = vadd.xlane.f32.xlu0 %v766
  %v768 = vpop.xlane.xlu0 %767
  %v769 = vsel %vm762, %v739, 0.0
  %770 = vadd.xlane.f32.xlu0 %v769
  %v771 = vpop.xlane.xlu0 %770
  %v772 = vsel %vm762, %v744, 0.0
  %773 = vadd.xlane.f32.xlu0 %v772
  %v774 = vpop.xlane.xlu0 %773
  %v775 = vsel %vm762, %v749, 0.0
  %776 = vadd.xlane.f32.xlu0 %v775
  %v777 = vpop.xlane.xlu0 %776
  %v778 = vsel %vm762, %v754, 0.0
  %779 = vadd.xlane.f32.xlu0 %v778
  %v780 = vpop.xlane.xlu0 %779
  %vm781 = vcmask 396288
  %v782 = vsel %vm781, %v759, 0.0
  %783 = vadd.xlane.f32.xlu0 %v782
  %v784 = vpop.xlane.xlu0 %783
  %v785 = vmul.f32 %v765, 0.020408163
  %v786 = vmul.f32 %v768, 0.020408163
  %v787 = vmul.f32 %v771, 0.020408163
  %v788 = vmul.f32 %v774, 0.020408163
  %v789 = vmul.f32 %v777, 0.020408163
  %v790 = vmul.f32 %v780, 0.020408163
  %v791 = vmul.f32 %v784, 0.020408163
  %v792 = vld [vmem:[%s2] sm:$0xff]
  %v793 = vld [vmem:[%s2 + $0x8] sm:$0xff]
  %v794 = vld [vmem:[%s2 + $0x10] sm:$0xff]
  %v795 = vld [vmem:[%s2 + $0x18] sm:$0xff]
  %v796 = vld [vmem:[%s2 + $0x20] sm:$0xff]
  %v797 = vld [vmem:[%s2 + $0x28] sm:$0xff]
  %v798 = vld [vmem:[%s2 + $0x30] sm:$0xf]
  %v799 = vadd.f32 %v785, %v792
  %v800 = vadd.f32 %v786, %v793
  %v801 = vadd.f32 %v787, %v794
  %v802 = vadd.f32 %v788, %v795
  %v803 = vadd.f32 %v789, %v796
  %v804 = vadd.f32 %v790, %v797
  %v805 = vadd.f32 %v791, %v798
  %vm806 = vcmask 7168
  %807 = vst.msk [vmem:[%s3] sm:$0xff] %vm806, %v799
  %808 = vst.msk [vmem:[%s3 + $0x8] sm:$0xff] %vm806, %v800
  %809 = vst.msk [vmem:[%s3 + $0x10] sm:$0xff] %vm806, %v801
  %810 = vst.msk [vmem:[%s3 + $0x18] sm:$0xff] %vm806, %v802
  %811 = vst.msk [vmem:[%s3 + $0x20] sm:$0xff] %vm806, %v803
  %812 = vst.msk [vmem:[%s3 + $0x28] sm:$0xff] %vm806, %v804
  %vm813 = vcmask 3072
  %814 = vst.msk [vmem:[%s3 + $0x30] sm:$0xf] %vm813, %v805
  // Predicated region
  $region14: #{tpu_custom_call.1} parent=0 // pred_check
    _
  $region15: #{tpu_custom_call.1} parent=0 // pred_check_branch
    %816 = sbr.rel (0) target = $region17
  $region16: #{tpu_custom_call.1} parent=0 // pred_region
    _
  $region17: #{tpu_custom_call.1} parent=0 // pred_fallthru
    _
  // Predicated region
  $region18: #{tpu_custom_call.1} parent=0 // pred_check
    _
  $region19: #{tpu_custom_call.1} parent=0 // pred_check_branch
    %818 = sbr.rel (0) target = $region21
  $region20: #{tpu_custom_call.1} parent=0 // pred_region
    _
  $region21: #{tpu_custom_call.1} parent=0 // pred_fallthru
    _

</llo_original>
